<compile_context>
chip_gen: v6e
topology: v6e:2x2x1
jax: 0.10.0
libtpu: 0.0.40
codegen_flags: <defaults>
</compile_context>

<pallas_src>
import functools
from collections import OrderedDict

import numpy as np
import jax
import jax.numpy as jnp
from jax import lax
from jax.experimental import pallas as pl
from jax.experimental.pallas import tpu as pltpu

ignore_label = 255
id_to_trainid = {-1: -1, 0: ignore_label, 1: ignore_label, 2: ignore_label,
                 3: ignore_label, 4: ignore_label, 5: ignore_label,
                 6: ignore_label, 7: 0, 8: 1, 9: ignore_label, 10: ignore_label,
                 11: 2, 12: 3, 13: 4, 14: ignore_label, 15: ignore_label,
                 16: ignore_label, 17: 5, 18: ignore_label, 19: 6, 20: 7,
                 21: 8, 22: 9, 23: 10, 24: 11, 25: 12, 26: 13, 27: 14,
                 28: 15, 29: ignore_label, 30: ignore_label, 31: 16,
                 32: 17, 33: 18}

_MAX_TABLE_KEY = max(id_to_trainid.keys())                       # 33
_VALID_PAIRS = tuple(sorted((int(k), int(v)) for k, v in id_to_trainid.items()
                            if 0 <= int(v) < ignore_label))      # 19 entries


# ----------------------------------------------------------------------------
# Tiling helpers: pad-to-block (no divisor hunting), lane-dense (rows, 128)
# ----------------------------------------------------------------------------
def _plan_rows(n_rows, target_rows, row_multiple):
    """Pick block rows RB (multiple of row_multiple) and tile count T with
    T*RB >= n_rows. Padding/masking replaces the old 'largest divisor' hunt."""
    rb = min(n_rows, max(1, int(target_rows)))
    rb = ((rb + row_multiple - 1) // row_multiple) * row_multiple
    rb = max(rb, row_multiple)
    t = (n_rows + rb - 1) // rb
    return t, rb


def _to_lanes(flat, n_tiles, block_rows, pad_mode="constant"):
    """Flat 1-D stream -> (T, RB, 128) lane-dense layout, padding the tail."""
    total = n_tiles * block_rows * 128
    pad = total - int(flat.shape[0])
    if pad:
        if pad_mode == "edge":      # duplicates last value: min/max-neutral
            flat = jnp.pad(flat, (0, pad), mode="edge")
        else:
            flat = jnp.pad(flat, (0, pad))
    return flat.reshape(n_tiles, block_rows, 128)


def _packed_to_hw3(packed, H, W, n_pix):
    """Packed int32 BGRx pixels -> (H, W, 3) uint8 (reference output layout)."""
    pix = packed.reshape(-1)[:n_pix]                       # (P,) int32
    b4 = lax.bitcast_convert_type(pix, jnp.uint8)          # (P, 4): byte0 = low bits
    return b4.reshape(H, W, 4)[..., :3]


# ----------------------------------------------------------------------------
# grid_maps — fused single-launch kernel (small maps): one HBM read, one divide
# ----------------------------------------------------------------------------
def _grid_maps_fused_kernel(x_ref, y_ref):
    x = x_ref[...]                                         # (rows, 128) f32
    mx = jnp.max(x, axis=(0, 1), keepdims=True)            # (1, 1)
    mn = jnp.min(x, axis=(0, 1), keepdims=True)
    diff = mx - mn
    diff = jnp.where(diff == 0.0, 1.0, diff)
    scale = 255.0 / diff                                   # single divide
    # Reference math: feats * 255 / (max - min), np.rint, clip, uint8.
    y = jnp.clip(jnp.rint(x * scale), 0.0, 255.0)
    y_ref[...] = y.astype(jnp.int32).astype(jnp.uint8)


# ----------------------------------------------------------------------------
# grid_maps — two-pass path: parallel per-tile min/max partials, then normalize
# ----------------------------------------------------------------------------
def _minmax_partial_kernel(x_ref, mx_ref, mn_ref):
    x = x_ref[0]                                           # (RB, 128) f32
    mx_ref[0] = jnp.max(x, axis=0, keepdims=True)          # (1, 128) partial
    mn_ref[0] = jnp.min(x, axis=0, keepdims=True)


def _grid_norm_kernel(scale_ref, x_ref, y_ref):
    s = scale_ref[0]                                       # scalar from SMEM
    y = jnp.clip(jnp.rint(x_ref[...] * s), 0.0, 255.0)
    y_ref[...] = y.astype(jnp.int32).astype(jnp.uint8)


def grid_maps_pallas(feats, block_rows=1024, fused_elems=1 << 19):
    """feats: (N, C, H, W) float32 (N expected 1, as the torch code implies)."""
    N, C, H, W = feats.shape
    gh = int(np.sqrt(C))
    gw = C // gh
    idx = gh * gw

    x = feats[:, :idx].astype(jnp.float32).reshape(-1)
    total = int(x.shape[0])
    n_rows = -(-total // 128)

    if total <= fused_elems:
        # Whole map resident in VMEM: min/max + normalize in one launch,
        # x is read from HBM exactly once.
        rb = max(32, ((n_rows + 31) // 32) * 32)
        x2 = _to_lanes(x, 1, rb, pad_mode="edge")[0]       # (rb, 128)
        y = pl.pallas_call(
            _grid_maps_fused_kernel,
            out_shape=jax.ShapeDtypeStruct((rb, 128), jnp.uint8),
        )(x2)
        y = y.reshape(-1)[:total]
    else:
        T, RB = _plan_rows(n_rows, block_rows, 32)
        x3 = _to_lanes(x, T, RB, pad_mode="edge")
        # Phase 1: per-tile partial min/max on a parallel axis (both v7x TCs
        # can stream HBM); tiny (T,1,128) partials reduced in plain XLA.
        mx_p, mn_p = pl.pallas_call(
            _minmax_partial_kernel,
            grid=(T,),
            in_specs=[pl.BlockSpec((1, RB, 128), lambda i: (i, 0, 0))],
            out_specs=[pl.BlockSpec((1, 1, 128), lambda i: (i, 0, 0)),
                       pl.BlockSpec((1, 1, 128), lambda i: (i, 0, 0))],
            out_shape=[jax.ShapeDtypeStruct((T, 1, 128), jnp.float32),
                       jax.ShapeDtypeStruct((T, 1, 128), jnp.float32)],
            compiler_params=pltpu.CompilerParams(
                dimension_semantics=("parallel",)),
        )(x3)
        mx = jnp.max(mx_p)
        mn = jnp.min(mn_p)
        diff = mx - mn
        diff = jnp.where(diff == 0.0, 1.0, diff)
        scale = (255.0 / diff).reshape(1).astype(jnp.float32)   # -> SMEM
        # Phase 2: tiled normalize, uint8 written directly from the kernel.
        y3 = pl.pallas_call(
            _grid_norm_kernel,
            grid=(T,),
            in_specs=[pl.BlockSpec(memory_space=pltpu.MemorySpace.SMEM),
                      pl.BlockSpec((1, RB, 128), lambda i: (i, 0, 0))],
            out_specs=pl.BlockSpec((1, RB, 128), lambda i: (i, 0, 0)),
            out_shape=jax.ShapeDtypeStruct((T, RB, 128), jnp.uint8),
            compiler_params=pltpu.CompilerParams(
                dimension_semantics=("parallel",)),
        )(scale, x3)
        y = y3.reshape(-1)[:total]

    y = y.reshape(N * idx, H, W)                           # uint8
    # Grid assembly = pure layout glue (same reshape/transpose chain as torch).
    g = y.reshape(gh, gw, 1, H, W).transpose(0, 3, 1, 4, 2).reshape(gh * H, gw * W, 1)
    return g[:, :, 0], str(H)


# ----------------------------------------------------------------------------
# Palette colorization — packed BGRx u32 select chain (single 19-entry chain)
# ----------------------------------------------------------------------------
def _packed_palette_bgr(palette):
    # Reference writes palette colors then reverses channels ([..., ::-1]), so
    # the output memory order is [c2, c1, c0]: pack byte0=c2, byte1=c1, byte2=c0.
    pal = np.asarray(palette).astype(np.int64)
    return tuple(int(r[2]) | (int(r[1]) << 8) | (int(r[0]) << 16) for r in pal)


def _colorize_kernel(seg_ref, out_ref, *, packed_palette):
    seg = seg_ref[0].astype(jnp.int32)                     # (RB, 128) from uint8
    # Default 0 (black) for labels outside [0, num_classes): matches the
    # reference's zero-initialized color_seg.
    col = jnp.zeros(seg.shape, jnp.int32)
    for cls, pv in enumerate(packed_palette):              # single select chain
        col = jnp.where(seg == cls, pv, col)
    out_ref[0] = col                                       # packed BGRx int32


def colorize_pallas(seg, palette, block_rows=1024):
    """seg: (H, W) int labels -> (H, W, 3) uint8 BGR (my_show_inference_result)."""
    H, W = seg.shape
    P = H * W
    n_rows = -(-P // 128)
    T, RB = _plan_rows(n_rows, block_rows, 32)
    seg_l = _to_lanes(seg.astype(jnp.uint8).reshape(-1), T, RB)   # 1 B/pixel in

    kernel = functools.partial(_colorize_kernel,
                               packed_palette=_packed_palette_bgr(palette))
    packed = pl.pallas_call(
        kernel,
        grid=(T,),
        in_specs=[pl.BlockSpec((1, RB, 128), lambda i: (i, 0, 0))],
        out_specs=pl.BlockSpec((1, RB, 128), lambda i: (i, 0, 0)),
        out_shape=jax.ShapeDtypeStruct((T, RB, 128), jnp.int32),
        compiler_params=pltpu.CompilerParams(
            dimension_semantics=("parallel",)),
    )(seg_l)
    return _packed_to_hw3(packed, H, W, P)


# ----------------------------------------------------------------------------
# Palette colorization + alpha blend — packed uint8 I/O, blend in-kernel
# ----------------------------------------------------------------------------
def _colorize_blend_kernel(seg_ref, img_ref, out_ref, *, packed_palette, opacity):
    seg = seg_ref[0].astype(jnp.int32)                     # (RB, 128)
    col = jnp.zeros(seg.shape, jnp.int32)
    for cls, pv in enumerate(packed_palette):              # single select chain
        col = jnp.where(seg == cls, pv, col)
    img = img_ref[0]                                       # packed BGRx int32
    w_img = jnp.float32(1.0 - opacity)
    w_col = jnp.float32(opacity)

    def blend_byte(shift):
        ic = ((img >> shift) & 0xFF).astype(jnp.float32)
        cc = ((col >> shift) & 0xFF).astype(jnp.float32)
        # Reference: (img*(1-op) + color*op).astype(uint8)  -> truncation.
        return (ic * w_img + cc * w_col).astype(jnp.int32)

    b0 = blend_byte(0)
    b1 = blend_byte(8)
    b2 = blend_byte(16)
    out_ref[0] = b0 | (b1 << 8) | (b2 << 16)               # packed BGRx int32


def colorize_blend_pallas(img, seg, palette, opacity=0.5, block_rows=1024):
    """img: (H, W, 3), seg: (H, W) -> blended (H, W, 3) uint8 (show_inference_result)."""
    H, W = seg.shape
    P = H * W
    n_rows = -(-P // 128)
    T, RB = _plan_rows(n_rows, block_rows, 32)
    seg_l = _to_lanes(seg.astype(jnp.uint8).reshape(-1), T, RB)
    # (H, W, 3) uint8 -> (H, W, 4) BGRx -> one packed int32 per pixel.
    # No HWC<->CHW transpose; 4 B/pixel of image DMA instead of 12 B f32.
    img_bgrx = jnp.pad(img.astype(jnp.uint8), ((0, 0), (0, 0), (0, 1)))
    img_packed = lax.bitcast_convert_type(img_bgrx, jnp.int32)    # (H, W)
    img_l = _to_lanes(img_packed.reshape(-1), T, RB)

    kernel = functools.partial(_colorize_blend_kernel,
                               packed_palette=_packed_palette_bgr(palette),
                               opacity=float(opacity))
    packed = pl.pallas_call(
        kernel,
        grid=(T,),
        in_specs=[pl.BlockSpec((1, RB, 128), lambda i: (i, 0, 0)),
                  pl.BlockSpec((1, RB, 128), lambda i: (i, 0, 0))],
        out_specs=pl.BlockSpec((1, RB, 128), lambda i: (i, 0, 0)),
        out_shape=jax.ShapeDtypeStruct((T, RB, 128), jnp.int32),
        compiler_params=pltpu.CompilerParams(
            dimension_semantics=("parallel",)),
    )(seg_l, img_l)
    return _packed_to_hw3(packed, H, W, P)


# ----------------------------------------------------------------------------
# id2trainId — one range test + 19 valid remaps (exact reference semantics)
# ----------------------------------------------------------------------------
def _id2trainid_kernel(label_ref, out_ref, *, valid_pairs, ignore_val, max_key):
    lab = label_ref[0]                                     # (RB, 128) int32
    in_table = jnp.logical_and(lab >= 0, lab <= max_key)
    # All keys in [0, max_key] that are not valid sources map to ignore_val;
    # -1 and anything outside the table pass through unchanged (== reference).
    out = jnp.where(in_table, ignore_val, lab)
    for k, v in valid_pairs:                               # unrolled, 19 entries
        out = jnp.where(lab == k, v, out)
    out_ref[0] = out


def id2trainid_pallas(label, block_rows=1024):
    H, W = label.shape
    P = H * W
    n_rows = -(-P // 128)
    T, RB = _plan_rows(n_rows, block_rows, 8)
    lab_l = _to_lanes(label.astype(jnp.int32).reshape(-1), T, RB)

    kernel = functools.partial(_id2trainid_kernel, valid_pairs=_VALID_PAIRS,
                               ignore_val=ignore_label, max_key=_MAX_TABLE_KEY)
    out = pl.pallas_call(
        kernel,
        grid=(T,),
        in_specs=[pl.BlockSpec((1, RB, 128), lambda i: (i, 0, 0))],
        out_specs=pl.BlockSpec((1, RB, 128), lambda i: (i, 0, 0)),
        out_shape=jax.ShapeDtypeStruct((T, RB, 128), jnp.int32),
        compiler_params=pltpu.CompilerParams(
            dimension_semantics=("parallel",)),
    )(lab_l)
    return out.reshape(-1)[:P].reshape(H, W)


# ----------------------------------------------------------------------------
# _parse_losses reduction — tiny; rows padded to a multiple of 8 sublanes.
# (Per review, plain XLA would be equally fine; no tuning effort spent here.)
# ----------------------------------------------------------------------------
def _parse_losses_kernel(vals_ref, inv_ref, mask_ref, means_ref, total_ref):
    sums = jnp.sum(vals_ref[...], axis=-1, keepdims=True)   # (R, 1)
    means = sums * inv_ref[...]                              # no divide in-kernel
    means_ref[...] = means
    total_ref[...] = jnp.sum(means * mask_ref[...], axis=(0, 1), keepdims=True)


def parse_losses_pallas(losses, lmax=128):
    rows, inv_counts, masks, row_names = [], [], [], []
    for name, value in losses.items():
        vs = value if isinstance(value, (list, tuple)) else [value]
        for v in vs:
            flat = jnp.ravel(v).astype(jnp.float32)
            n = int(flat.shape[0])
            assert n <= lmax
            rows.append(jnp.pad(flat, (0, lmax - n)))
            inv_counts.append(1.0 / n)
            masks.append(1.0 if 'loss' in name else 0.0)
            row_names.append(name)

    n_real = len(rows)
    r_pad = ((n_real + 7) // 8) * 8                         # sublane multiple of 8
    for _ in range(r_pad - n_real):
        rows.append(jnp.zeros((lmax,), jnp.float32))
        inv_counts.append(0.0)
        masks.append(0.0)

    vals = jnp.stack(rows)                                  # (R, LMAX) lane-dense
    inv_a = jnp.array(inv_counts, jnp.float32).reshape(-1, 1)
    mask_a = jnp.array(masks, jnp.float32).reshape(-1, 1)
    R = vals.shape[0]

    means, total = pl.pallas_call(
        _parse_losses_kernel,
        grid=(1,),
        in_specs=[pl.BlockSpec((R, lmax), lambda i: (0, 0)),
                  pl.BlockSpec((R, 1), lambda i: (0, 0)),
                  pl.BlockSpec((R, 1), lambda i: (0, 0))],
        out_specs=[pl.BlockSpec((R, 1), lambda i: (0, 0)),
                   pl.BlockSpec((1, 1), lambda i: (0, 0))],
        out_shape=[jax.ShapeDtypeStruct((R, 1), jnp.float32),
                   jax.ShapeDtypeStruct((1, 1), jnp.float32)],
    )(vals, inv_a, mask_a)

    # Single host<->device sync for everything that goes in log_vars.
    means_np, total_np = jax.device_get((means, total))
    means_np = np.asarray(means_np)[:n_real, 0]
    log_vars = OrderedDict()
    for name in losses.keys():
        log_vars[name] = float(sum(m for m, rn in zip(means_np, row_names) if rn == name))
    log_vars['loss'] = float(total_np[0, 0])
    loss = total[0, 0]
    return loss, log_vars


# ----------------------------------------------------------------------------
# Thin "module" wrapper mirroring BaseSegmentor's concrete methods.
# ----------------------------------------------------------------------------
class BaseSegmentorPallas:
    def __init__(self, num_classes=19):
        self.fp16_enabled = False
        self.CLASSES = tuple(f"class_{i}" for i in range(num_classes))
        # Same fallback palette generation as the torch path (np seed 42).
        state = np.random.get_state()
        np.random.seed(42)
        self.PALETTE = np.random.randint(0, 255, size=(num_classes, 3))
        np.random.set_state(state)

    def _parse_losses(self, losses):
        return parse_losses_pallas(losses)

    def grid_maps(self, feats, block_rows=1024, fused_elems=1 << 19):
        return grid_maps_pallas(feats, block_rows=block_rows, fused_elems=fused_elems)

    def show_inference_result(self, img, seg, opacity=0.5):
        return colorize_blend_pallas(img, seg, self.PALETTE, opacity)

    def my_show_inference_result(self, seg):
        return colorize_pallas(seg, self.PALETTE)


if __name__ == "__main__":
    key = jax.random.PRNGKey(0)
    (k_feat, k_feat2, k_loss1, k_loss2a, k_loss2b,
     k_acc, k_img, k_seg, k_lbl) = jax.random.split(key, 9)

    seg_model = BaseSegmentorPallas(num_classes=19)

    # grid_maps — fused single-launch path (small feature map).
    feats = jax.random.normal(k_feat, (1, 4, 32, 32), jnp.float32)
    grid_img, dim = seg_model.grid_maps(feats)
    jax.block_until_ready(grid_img)
    assert grid_img.shape == (64, 64) and grid_img.dtype == jnp.uint8

    # grid_maps — forced two-pass tiled path (parallel partial min/max +
    # normalize), exercising pad-to-block and a multi-tile grid (T=3).
    feats2 = jax.random.normal(k_feat2, (1, 9, 32, 32), jnp.float32)
    grid_img2, dim2 = seg_model.grid_maps(feats2, block_rows=32, fused_elems=0)
    jax.block_until_ready(grid_img2)
    assert grid_img2.shape == (96, 96) and grid_img2.dtype == jnp.uint8

    # _parse_losses input: dict of tensors / lists of tensors.
    losses = OrderedDict(
        decode_loss_seg=jax.random.uniform(k_loss1, (8,), jnp.float32),
        aux_loss_seg=[jax.random.uniform(k_loss2a, (4,), jnp.float32),
                      jax.random.uniform(k_loss2b, (4,), jnp.float32)],
        decode_acc_seg=jax.random.uniform(k_acc, (2,), jnp.float32) * 100.0,
    )
    loss, log_vars = seg_model._parse_losses(losses)
    jax.block_until_ready(loss)

    # colorize / blend: W=200 (not a multiple of 128) exercises flatten+pad.
    img = jax.random.randint(k_img, (64, 200, 3), 0, 256, jnp.int32)
    seg = jax.random.randint(k_seg, (64, 200), 0, 19, jnp.int32)
    blended = seg_model.show_inference_result(img, seg, opacity=0.5)       # T=1
    color_seg = colorize_pallas(seg, seg_model.PALETTE, block_rows=32)     # T=4
    jax.block_until_ready((blended, color_seg))
    assert blended.shape == (64, 200, 3) and blended.dtype == jnp.uint8
    assert color_seg.shape == (64, 200, 3) and color_seg.dtype == jnp.uint8

    # id2trainId remapping (3000 labels -> 24 lane-rows, T=3 with RB=8).
    label = jax.random.randint(k_lbl, (50, 60), -1, 34, jnp.int32)
    trainid = id2trainid_pallas(label, block_rows=8)
    jax.block_until_ready(trainid)
    assert trainid.shape == (50, 60)

    print("KERNEL_OK")
</pallas_src>

<mosaic_0001>
module attributes {stable_mosaic.version = 11 : i64} {
  func.func @_grid_maps_fused_kernel(%arg0: memref<32x128xf32, #tpu.memory_space<vmem>>, %arg1: memref<32x128xi8, #tpu.memory_space<vmem>>) attributes {dimension_semantics = [], scalar_prefetch = 0 : i64, scratch_operands = 0 : i64, tpu.core_type = #tpu.core_type<tc>} {
    %c0 = arith.constant 0 : index
    %c0_0 = arith.constant 0 : index
    %0 = vector.load %arg0[%c0, %c0_0] : memref<32x128xf32, #tpu.memory_space<vmem>>, vector<32x128xf32>
    %1 = vector.shape_cast %0 : vector<32x128xf32> to vector<1x32x128xf32>
    %cst = arith.constant dense<0xFF800000> : vector<1xf32>
    %2 = vector.multi_reduction <maximumf>, %1, %cst [1, 2] : vector<1x32x128xf32> to vector<1xf32>
    %3 = vector.shape_cast %2 : vector<1xf32> to vector<1x1x1xf32>
    %4 = vector.extract %3[0, 0, 0] : f32 from vector<1x1x1xf32>
    %5 = vector.broadcast %4 : f32 to vector<1x1xf32>
    %6 = vector.shape_cast %0 : vector<32x128xf32> to vector<1x32x128xf32>
    %cst_1 = arith.constant dense<0x7F800000> : vector<1xf32>
    %7 = vector.multi_reduction <minimumf>, %6, %cst_1 [1, 2] : vector<1x32x128xf32> to vector<1xf32>
    %8 = vector.shape_cast %7 : vector<1xf32> to vector<1x1x1xf32>
    %9 = vector.extract %8[0, 0, 0] : f32 from vector<1x1x1xf32>
    %10 = vector.broadcast %9 : f32 to vector<1x1xf32>
    %11 = arith.subf %5, %10 : vector<1x1xf32>
    %cst_2 = arith.constant 0.000000e+00 : f32
    %12 = vector.broadcast %cst_2 : f32 to vector<1x1xf32>
    %13 = arith.cmpf oeq, %11, %12 : vector<1x1xf32>
    %cst_3 = arith.constant 1.000000e+00 : f32
    %14 = vector.broadcast %cst_3 : f32 to vector<1x1xf32>
    %15 = arith.select %13, %14, %11 : vector<1x1xi1>, vector<1x1xf32>
    %cst_4 = arith.constant 2.550000e+02 : f32
    %16 = vector.broadcast %cst_4 : f32 to vector<1x1xf32>
    %17 = arith.divf %16, %15 : vector<1x1xf32>
    %18 = vector.broadcast %17 : vector<1x1xf32> to vector<32x128xf32>
    %19 = arith.mulf %0, %18 : vector<32x128xf32>
    %20 = math.roundeven %19 : vector<32x128xf32>
    %cst_5 = arith.constant 0.000000e+00 : f32
    %cst_6 = arith.constant 2.550000e+02 : f32
    %21 = vector.broadcast %cst_5 : f32 to vector<32x128xf32>
    %22 = arith.maximumf %21, %20 : vector<32x128xf32>
    %23 = vector.broadcast %cst_6 : f32 to vector<32x128xf32>
    %24 = arith.minimumf %23, %22 : vector<32x128xf32>
    %25 = arith.fptosi %24 : vector<32x128xf32> to vector<32x128xi32>
    %26 = arith.trunci %25 : vector<32x128xi32> to vector<32x128xi8>
    %c0_7 = arith.constant 0 : index
    %c0_8 = arith.constant 0 : index
    %27 = vector.load %arg1[%c0_7, %c0_8] : memref<32x128xi8, #tpu.memory_space<vmem>>, vector<32x128xi8>
    tpu.vector_store %arg1[%c0_7, %c0_8], %26 {strides = array<i32>} : memref<32x128xi8, #tpu.memory_space<vmem>>, vector<32x128xi8>,
    return
  }
}

</mosaic_0001>

<llo_original>
// kernel: tpu_custom_call.1
$region0: #{tpu_custom_call.1}
  #allocation0 [shape = 'u32[]', space=smem, size = 0x4, offset = 0x4, fixed_abs, tag = 'smem constant byte address 0x4 - core index']
  #allocation1 [shape = 'u32[144,128]{1,0:T(1,128)}', space=vmem, size = 0x12000, scoped, tag = 'internal scratch']
  %s0 = inlined_call_operand.hbm [shape: f32[32,128], index: 0, kind: input, shape index: {}]
  %s1 = inlined_call_operand.hbm [shape: u8[32,128], index: 1, kind: output, shape index: {}]
  %s2 = sld [smem:[#allocation0]]
  $region18: #{tpu_custom_call.1} parent=0
    _
  %s4 = ssub.s32 1, %s2
  %s5 = scalar_select 0, %s4, %s2
  $region1: #{tpu_custom_call.1} parent=0
    #allocation2 [shape = 'u8[16384]{0}', space=vmem, size = 0x4000, scoped, tag = 'input window, operand 0, single buffered']
    #allocation3 [shape = 's32[1]{0}', space=sflag, size = 0x4, scoped, tag = 'scoped memory for tpu_custom_call.1']
    #allocation4 [shape = 's32[1]{0}', space=sflag, size = 0x4, scoped, tag = 'scoped memory for tpu_custom_call.1']
    #allocation5 [shape = 'u8[4096]{0}', space=vmem, size = 0x1000, scoped, tag = 'output window, operand 0, single buffered']
    %6 = vsyncpa [#allocation3], 0
    %7 = vsyncpa [#allocation4], 0
    // Predicated region
    $region2: #{tpu_custom_call.1} parent=1 // pred_check
      _
    $region3: #{tpu_custom_call.1} parent=1 // pred_check_branch
      %9 = sbr.rel (0) target = $region5
    $region4: #{tpu_custom_call.1} parent=1 // pred_region
      %s11 = ssub.s32 512, 512
      %12 = vsyncadd [#allocation3], %s11
      %s13 = sshll.u32 [#allocation2], 4
      %s14 = int_to_ptr.vmem [resolvable:$true] %s13
      %19 = dma.hbm_to_vmem [thread:$0]  %s0, 512, %s14, [#allocation3], 128, 128, 8
    $region5: #{tpu_custom_call.1} parent=1 // pred_fallthru
      _
    // Predicated region
    $region6: #{tpu_custom_call.1} parent=1 // pred_check
      _
    $region7: #{tpu_custom_call.1} parent=1 // pred_check_branch
      %21 = sbr.rel (0) target = $region9
    $region8: #{tpu_custom_call.1} parent=1 // pred_region
      %22 = dma.done [#allocation3], 512
    $region9: #{tpu_custom_call.1} parent=1 // pred_fallthru
      _
    %v23 = vld [vmem:[#allocation2] sm:$0xff]
    %v24 = vld [vmem:[#allocation2 + $0x8] sm:$0xff]
    %v25 = vld [vmem:[#allocation2 + $0x10] sm:$0xff]
    %v26 = vld [vmem:[#allocation2 + $0x18] sm:$0xff]
    %v27 = vmax.f32 %v23, %v24
    %v28 = vmax.f32 %v25, %v26
    %v29 = vmax.f32 %v27, %v28
    %30 = vmax.xlane.f32.xlu0 %v29
    %v31 = vpop.xlane.xlu0 %30
    %v32 = vrot.slane %v31, 4
    %v33 = vmax.f32 %v31, %v32
    %v34 = vrot.slane %v33, 2
    %v35 = vmax.f32 %v33, %v34
    %v36 = vrot.slane %v35, 1
    %v37 = vmax.f32 %v35, %v36
    %s38 = vtos %v37
    %v39 = vstv %s38
    %v40 = vmin.f32 %v23, %v24
    %v41 = vmin.f32 %v25, %v26
    %v42 = vmin.f32 %v40, %v41
    %43 = vmin.xlane.f32.xlu0 %v42
    %v44 = vpop.xlane.xlu0 %43
    %v45 = vrot.slane %v44, 4
    %v46 = vmin.f32 %v44, %v45
    %v47 = vrot.slane %v46, 2
    %v48 = vmin.f32 %v46, %v47
    %v49 = vrot.slane %v48, 1
    %v50 = vmin.f32 %v48, %v49
    %s51 = vtos %v50
    %v52 = vstv %s51
    %v53 = vsub.f32 %v39, %v52
    %vm54 = vcmp.eq.f32.partialorder %v53, 0.0
    %v55 = vsel %vm54, 1.0, %v53
    %v56 = vrcp.pop %v55
    %v57 = vmul.f32 255.0, %v56
    %v58 = vmul.f32 %v23, %v57
    %v59 = vmul.f32 %v24, %v57
    %v60 = vmul.f32 %v25, %v57
    %v61 = vmul.f32 %v26, %v57
    %v62 = vround.ne.pseudo %v58
    %v63 = vround.ne.pseudo %v59
    %v64 = vround.ne.pseudo %v60
    %v65 = vround.ne.pseudo %v61
    %v66 = vmax.f32 %v62, 0.0
    %v67 = vmax.f32 %v63, 0.0
    %v68 = vmax.f32 %v64, 0.0
    %v69 = vmax.f32 %v65, 0.0
    %v70 = vmin.f32 %v66, 255.0
    %v71 = vmin.f32 %v67, 255.0
    %v72 = vmin.f32 %v68, 255.0
    %v73 = vmin.f32 %v69, 255.0
    %v74 = vcvt.f32.s32.to.zero.pseudo %v70
    %v75 = vcvt.f32.s32.to.zero.pseudo %v71
    %v76 = vcvt.f32.s32.to.zero.pseudo %v72
    %v77 = vcvt.f32.s32.to.zero.pseudo %v73
    %v78 = vpack.c.b16 %v75, %v74
    %v79 = vpack.c.b16 %v77, %v76
    %v80 = vpack.c.b8 %v79, %v78
    %81 = vst [vmem:[#allocation5] sm:$0xff] %v80
    // Predicated region
    $region10: #{tpu_custom_call.1} parent=1 // pred_check
      _
    $region11: #{tpu_custom_call.1} parent=1 // pred_check_branch
      %83 = sbr.rel (0) target = $region13
    $region12: #{tpu_custom_call.1} parent=1 // pred_region
      %s85 = ssub.s32 128, 128
      %86 = vsyncadd [#allocation4], %s85
      %s88 = sshll.u32 [#allocation5], 4
      %s89 = int_to_ptr.vmem [resolvable:$true] %s88
      %91 = dma.vmem_to_hbm [thread:$0]  %s89, 128, %s1, [#allocation4]
    $region13: #{tpu_custom_call.1} parent=1 // pred_fallthru
      _
    // Predicated region
    $region14: #{tpu_custom_call.1} parent=1 // pred_check
      _
    $region15: #{tpu_custom_call.1} parent=1 // pred_check_branch
      %93 = sbr.rel (0) target = $region17
    $region16: #{tpu_custom_call.1} parent=1 // pred_region
      %94 = dma.done [#allocation4], 128
    $region17: #{tpu_custom_call.1} parent=1 // pred_fallthru
      _
    %95 = vsyncpa [#allocation3], 1
    %96 = vsyncpa [#allocation4], 1

</llo_original>
